<compile_context>
chip_gen: v5e
topology: v5e:2x2
jax: 0.10.0
libtpu: 0.0.40
codegen_flags: <defaults>
</compile_context>

<pallas_src>
import functools

import jax
import jax.numpy as jnp
from jax import lax
from jax.experimental import pallas as pl
from jax.experimental.pallas import tpu as pltpu

_MIB = 1 << 20


def tsg_kernel(x_ref, p_ref, o_ref, *, eps, chunk, params_resident):
    # x_ref: (TS, B, D) native dtype
    # p_ref: f32 params; resident: (S_pad, 1, 3) full array, else (TS, 1, 3)
    # o_ref: (TS, B, D)
    TS, B, D = x_ref.shape
    n_chunks = D // chunk  # wrapper guarantees chunk | D

    if params_resident:
        start = pl.multiple_of(pl.program_id(0) * TS, TS)
        p = p_ref[pl.ds(start, TS), :, :]          # (TS, 1, 3)
    else:
        p = p_ref[...]                             # (TS, 1, 3)
    p = p.astype(jnp.float32)
    alpha = p[:, :, 0:1]                           # (TS, 1, 1)
    gamma = p[:, :, 1:2]
    beta = p[:, :, 2:3]

    # embedding[s, b] = sqrt(sum_d x[s,b,d]^2 + eps) * alpha[s]
    if n_chunks == 1:
        xf = x_ref[...].astype(jnp.float32)
        sq_sum = jnp.sum(xf * xf, axis=2, keepdims=True)          # (TS, B, 1)
    else:
        # Chunked over D: f32 temporaries are (TS, B, chunk), never a full tile.
        def sq_body(c, acc):
            off = pl.multiple_of(c * chunk, chunk)
            xc = x_ref[:, :, pl.ds(off, chunk)].astype(jnp.float32)
            return acc + jnp.sum(xc * xc, axis=2, keepdims=True)

        sq_sum = lax.fori_loop(0, n_chunks, sq_body,
                               jnp.zeros((TS, B, 1), jnp.float32))

    emb = jnp.sqrt(sq_sum + eps) * alpha                           # (TS, B, 1)
    # norm[s] = gamma[s] * rsqrt(mean_b emb[s,b]^2 + eps)
    mean_e2 = jnp.mean(emb * emb, axis=1, keepdims=True)           # (TS, 1, 1)
    norm = gamma * lax.rsqrt(mean_e2 + eps)
    gate = 1.0 + jnp.tanh(emb * norm + beta)                       # (TS, B, 1) f32

    # Apply gate in f32; cast only the final product (closer to the f32 ref).
    if n_chunks == 1:
        o_ref[...] = (x_ref[...].astype(jnp.float32) * gate).astype(o_ref.dtype)
    else:
        @pl.loop(0, n_chunks)
        def _(c):
            off = pl.multiple_of(c * chunk, chunk)
            xc = x_ref[:, :, pl.ds(off, chunk)].astype(jnp.float32)
            o_ref[:, :, pl.ds(off, chunk)] = (xc * gate).astype(o_ref.dtype)


def _is_small_vmem_chip():
    """True for v7x-class chips (64 MiB VMEM per TC, 2 TCs); conservative default."""
    try:
        cap = int(pltpu.get_tpu_info().vmem_capacity_bytes)
        return cap <= 80 * _MIB
    except Exception:
        pass
    try:
        kind = str(jax.devices()[0].device_kind).lower()
        if "v4" in kind or "v5" in kind or "v6" in kind:
            return False
        if "7" in kind:
            return True
    except Exception:
        pass
    return True  # unknown hardware: use the tighter (v7x) budgets


def _pick_chunk(D):
    """Largest 128-multiple chunk dividing D (bounds the f32 temp footprint)."""
    for c in (512, 256, 128):
        if D > c and D % c == 0:
            return c
    return D


def _plan(S, B, D, itemsize):
    small_vmem = _is_small_vmem_chip()
    two_core = small_vmem                      # v7x proxy: 2 TCs share the seq grid
    if small_vmem:
        target_tile, vmem_cap = 4 * _MIB, 48 * _MIB     # v7x: leave headroom under 64 MiB
    else:
        target_tile, vmem_cap = 8 * _MIB, 96 * _MIB     # v5e/v6e: 128 MiB physical

    chunk = _pick_chunk(D)
    row_x = B * D * itemsize                   # one seq row of x (and of out)
    row_f32 = B * chunk * 4                    # f32 chunk temp per seq row
    params_resident = S <= 256                 # resident params stay tiny in VMEM
    row_params = 0 if params_resident else 4096  # (TS,1,3) block: worst-case padded row
    per_row = 4 * row_x + 2 * row_f32 + 2 * row_params + 256

    slack = 8 * _MIB
    resident_params_bytes = (2 * 512 * 4096) if params_resident else 0
    budget = max(per_row, vmem_cap - slack - resident_params_bytes)
    ts = max(1, min(S, 2048, target_tile // max(1, row_x), budget // per_row))

    if two_core and S > 1:
        # Guarantee enough (ideally even) grid steps for 2-TensorCore sharding.
        ts = min(ts, max(1, pl.cdiv(S, min(8, S))))
        steps = pl.cdiv(S, ts)
        if steps > 1 and steps % 2 == 1 and steps < S:
            ts = max(1, pl.cdiv(S, steps + 1))

    steps = pl.cdiv(S, ts)
    s_pad = steps * ts
    vmem_limit = int(min(vmem_cap,
                         max(32 * _MIB, per_row * ts + resident_params_bytes + slack)))
    return ts, steps, s_pad, chunk, params_resident, vmem_limit


def tsg_forward(x, alpha, gamma, beta, epsilon=1e-5):
    """x: (seq_len, batch, dim); alpha/gamma/beta: any shape with seq_len elements."""
    S, B, D = x.shape
    itemsize = jnp.dtype(x.dtype).itemsize
    TS, steps, S_pad, chunk, params_resident, vmem_limit = _plan(S, B, D, itemsize)

    # Fuse the three (1, S, 1) parameters into one f32 (S_pad, 1, 3) array,
    # zero-padded to steps*TS rows so in-kernel slices are always in-bounds
    # (padded rows produce gate == 1 and are masked on writeback anyway).
    p = jnp.stack([alpha.reshape(S), gamma.reshape(S), beta.reshape(S)], axis=-1)
    p = p.astype(jnp.float32)
    if S_pad > S:
        p = jnp.pad(p, ((0, S_pad - S), (0, 0)))
    params = p.reshape(S_pad, 1, 3)

    if params_resident:
        p_spec = pl.BlockSpec((S_pad, 1, 3), lambda i: (0, 0, 0))   # fetched once, resident
    else:
        p_spec = pl.BlockSpec((TS, 1, 3), lambda i: (i, 0, 0))      # tiny per-step DMA

    kernel = functools.partial(tsg_kernel, eps=float(epsilon), chunk=chunk,
                               params_resident=params_resident)

    cost = pl.CostEstimate(
        flops=5 * S * B * D,
        transcendentals=2 * S * B + S,
        bytes_accessed=2 * S * B * D * itemsize + S_pad * 12,
    )

    return pl.pallas_call(
        kernel,
        out_shape=jax.ShapeDtypeStruct((S, B, D), x.dtype),
        grid=(steps,),
        in_specs=[pl.BlockSpec((TS, B, D), lambda i: (i, 0, 0)), p_spec],
        out_specs=pl.BlockSpec((TS, B, D), lambda i: (i, 0, 0)),
        compiler_params=pltpu.CompilerParams(
            dimension_semantics=("parallel",),
            vmem_limit_bytes=vmem_limit,
        ),
        cost_estimate=cost,
    )(x, params)


def tsg_ref(x, alpha, gamma, beta, epsilon=1e-5):
    """Pure-JAX reference, literal transcription of the PyTorch forward."""
    xp = jnp.transpose(x, (1, 0, 2))                          # (B, S, D)
    a = alpha.reshape(1, -1, 1)
    g = gamma.reshape(1, -1, 1)
    b = beta.reshape(1, -1, 1)
    embedding = jnp.sqrt(jnp.sum(xp * xp, axis=2, keepdims=True) + epsilon) * a
    norm = g / jnp.sqrt(jnp.mean(embedding * embedding, axis=0, keepdims=True) + epsilon)
    gate = 1.0 + jnp.tanh(embedding * norm + b)
    return jnp.transpose(xp * gate, (1, 0, 2))


if __name__ == "__main__":
    seq_len, batch, dim = 8, 2, 32

    key = jax.random.PRNGKey(0)
    kx, ka, kg, kb = jax.random.split(key, 4)

    # Input (seq_len, batch, dim), matching the PyTorch axis convention.
    x = jax.random.normal(kx, (seq_len, batch, dim), dtype=jnp.float32)

    # nn.Parameter shapes are (1, seq_len, 1).  __init__ uses ones/zeros (gate
    # would be identically 1); perturb deterministically so gating is exercised.
    alpha = (1.0 + 0.1 * jax.random.normal(ka, (1, seq_len, 1))).astype(jnp.float32)
    gamma = (0.5 * jax.random.normal(kg, (1, seq_len, 1))).astype(jnp.float32)
    beta = (0.1 * jax.random.normal(kb, (1, seq_len, 1))).astype(jnp.float32)

    out = jax.block_until_ready(tsg_forward(x, alpha, gamma, beta))
    ref = tsg_ref(x, alpha, gamma, beta)

    assert out.shape == x.shape
    assert jnp.allclose(out, ref, atol=1e-5, rtol=1e-5), "mismatch vs reference"

    print("KERNEL_OK")
</pallas_src>

<mosaic_0001>
module attributes {stable_mosaic.version = 11 : i64} {
  func.func @tsg_kernel(%arg0: i32, %arg1: memref<1x2x32xf32, #tpu.memory_space<vmem>>, %arg2: memref<8x1x3xf32, #tpu.memory_space<vmem>>, %arg3: memref<1x2x32xf32, #tpu.memory_space<vmem>>) attributes {dimension_semantics = [#tpu.dimension_semantics<parallel>], iteration_bounds = array<i64: 8>, scalar_prefetch = 0 : i64, scratch_operands = 0 : i64, tpu.core_type = #tpu.core_type<tc>, window_params = [{transform_indices = @transform_0, window_bounds = array<i64: 1, 2, 32>}, {pipeline_mode = #tpu.pipeline_mode<synchronous>, transform_indices = @transform_1, window_bounds = array<i64: 8, 1, 3>}, {transform_indices = @transform_2, window_bounds = array<i64: 1, 2, 32>}]} {
    %c1_i32 = arith.constant 1 : i32
    %0 = arith.muli %arg0, %c1_i32 : i32
    %1 = tpu.assume_multiple %0, 1 : i32
    %2 = arith.index_cast %1 : i32 to index
    %c0 = arith.constant 0 : index
    %c0_0 = arith.constant 0 : index
    %3 = vector.load %arg2[%2, %c0, %c0_0] : memref<8x1x3xf32, #tpu.memory_space<vmem>>, vector<1x1x3xf32>
    %4 = vector.extract_strided_slice %3 {offsets = [0, 0, 0], sizes = [1, 1, 1], strides = [1, 1, 1]} : vector<1x1x3xf32> to vector<1x1x1xf32>
    %5 = vector.extract_strided_slice %3 {offsets = [0, 0, 1], sizes = [1, 1, 1], strides = [1, 1, 1]} : vector<1x1x3xf32> to vector<1x1x1xf32>
    %6 = vector.extract_strided_slice %3 {offsets = [0, 0, 2], sizes = [1, 1, 1], strides = [1, 1, 1]} : vector<1x1x3xf32> to vector<1x1x1xf32>
    %c0_1 = arith.constant 0 : index
    %c0_2 = arith.constant 0 : index
    %c0_3 = arith.constant 0 : index
    %7 = vector.load %arg1[%c0_1, %c0_2, %c0_3] : memref<1x2x32xf32, #tpu.memory_space<vmem>>, vector<1x2x32xf32>
    %8 = arith.mulf %7, %7 : vector<1x2x32xf32>
    %cst = arith.constant dense<0.000000e+00> : vector<1x2xf32>
    %9 = vector.multi_reduction <add>, %8, %cst [2] : vector<1x2x32xf32> to vector<1x2xf32>
    %10 = vector.shape_cast %9 : vector<1x2xf32> to vector<1x2x1xf32>
    %cst_4 = arith.constant 9.99999974E-6 : f32
    %11 = vector.broadcast %cst_4 : f32 to vector<1x2x1xf32>
    %12 = arith.addf %10, %11 : vector<1x2x1xf32>
    %13 = math.sqrt %12 : vector<1x2x1xf32>
    %14 = vector.broadcast %4 : vector<1x1x1xf32> to vector<1x2x1xf32>
    %15 = arith.mulf %13, %14 : vector<1x2x1xf32>
    %16 = arith.mulf %15, %15 : vector<1x2x1xf32>
    %cst_5 = arith.constant dense<0.000000e+00> : vector<1x1xf32>
    %17 = vector.multi_reduction <add>, %16, %cst_5 [1] : vector<1x2x1xf32> to vector<1x1xf32>
    %18 = vector.shape_cast %17 : vector<1x1xf32> to vector<1x1x1xf32>
    %cst_6 = arith.constant 2.000000e+00 : f32
    %19 = vector.broadcast %cst_6 : f32 to vector<1x1x1xf32>
    %20 = arith.divf %18, %19 : vector<1x1x1xf32>
    %cst_7 = arith.constant 9.99999974E-6 : f32
    %21 = vector.broadcast %cst_7 : f32 to vector<1x1x1xf32>
    %22 = arith.addf %20, %21 : vector<1x1x1xf32>
    %23 = math.rsqrt %22 : vector<1x1x1xf32>
    %24 = arith.mulf %5, %23 : vector<1x1x1xf32>
    %25 = vector.broadcast %24 : vector<1x1x1xf32> to vector<1x2x1xf32>
    %26 = arith.mulf %15, %25 : vector<1x2x1xf32>
    %27 = vector.broadcast %6 : vector<1x1x1xf32> to vector<1x2x1xf32>
    %28 = arith.addf %26, %27 : vector<1x2x1xf32>
    %29 = math.tanh %28 : vector<1x2x1xf32>
    %cst_8 = arith.constant 1.000000e+00 : f32
    %30 = vector.broadcast %cst_8 : f32 to vector<1x2x1xf32>
    %31 = arith.addf %30, %29 : vector<1x2x1xf32>
    %c0_9 = arith.constant 0 : index
    %c0_10 = arith.constant 0 : index
    %c0_11 = arith.constant 0 : index
    %32 = vector.load %arg1[%c0_9, %c0_10, %c0_11] : memref<1x2x32xf32, #tpu.memory_space<vmem>>, vector<1x2x32xf32>
    %33 = vector.broadcast %31 : vector<1x2x1xf32> to vector<1x2x32xf32>
    %34 = arith.mulf %32, %33 : vector<1x2x32xf32>
    %c0_12 = arith.constant 0 : index
    %c0_13 = arith.constant 0 : index
    %c0_14 = arith.constant 0 : index
    %35 = vector.load %arg3[%c0_12, %c0_13, %c0_14] : memref<1x2x32xf32, #tpu.memory_space<vmem>>, vector<1x2x32xf32>
    tpu.vector_store %arg3[%c0_12, %c0_13, %c0_14], %34 {strides = array<i32>} : memref<1x2x32xf32, #tpu.memory_space<vmem>>, vector<1x2x32xf32>,
    return
  }
  func.func @transform_0(%arg0: i32) -> (i32, i32, i32) {
    %c0_i32 = arith.constant 0 : i32
    %c0_i32_0 = arith.constant 0 : i32
    %c0_i32_1 = arith.constant 0 : i32
    return %arg0, %c0_i32, %c0_i32_0 : i32, i32, i32
  }
  func.func @transform_1(%arg0: i32) -> (i32, i32, i32) {
    %c0_i32 = arith.constant 0 : i32
    %c0_i32_0 = arith.constant 0 : i32
    %c0_i32_1 = arith.constant 0 : i32
    %c0_i32_2 = arith.constant 0 : i32
    return %c0_i32, %c0_i32_0, %c0_i32_1 : i32, i32, i32
  }
  func.func @transform_2(%arg0: i32) -> (i32, i32, i32) {
    %c0_i32 = arith.constant 0 : i32
    %c0_i32_0 = arith.constant 0 : i32
    %c0_i32_1 = arith.constant 0 : i32
    return %arg0, %c0_i32, %c0_i32_0 : i32, i32, i32
  }
}

</mosaic_0001>

<llo_original>
// kernel: tpu_custom_call.1
$region0: #{tpu_custom_call.1}
  #allocation0 [shape = 'u32[]', space=smem, size = 0x4, offset = 0x4, fixed_abs, tag = 'smem constant byte address 0x4 - core index']
  #allocation1 [shape = 'u32[72,128]{1,0:T(1,128)}', space=vmem, size = 0x9000, scoped, tag = 'internal scratch']
  %s0 = inlined_call_operand.hbm [shape: f32[8,2,32], index: 0, kind: input, shape index: {}]
  %s1 = inlined_call_operand.vmem [shape: f32[8,1,3], index: 1, kind: input, shape index: {}]
  %s2 = inlined_call_operand.hbm [shape: f32[8,2,32], index: 2, kind: output, shape index: {}]
  %s3 = sld [smem:[#allocation0]]
  $region45: #{tpu_custom_call.1} parent=0
    _
  %s5 = ssub.s32 1, %s3
  %s6 = scalar_select 0, %s5, %s3
  $region1: #{tpu_custom_call.1} parent=0
    #allocation2 [shape = 'u8[2048]{0}', space=vmem, size = 0x800, scoped, tag = 'input window, operand 0']
    #allocation3 [shape = 's32[2]{0}', space=sflag, size = 0x8, scoped, tag = 'scoped memory for tpu_custom_call.1']
    #allocation4 [shape = 's32[2]{0}', space=sflag, size = 0x8, scoped, tag = 'scoped memory for tpu_custom_call.1']
    #allocation5 [shape = 'u8[2048]{0}', space=vmem, size = 0x800, scoped, tag = 'output window, operand 0']
    %7 = vsyncpa [#allocation3], 0
    %s8 = scalar_lea.sflag [#allocation3], 1
    %9 = vsyncpa %s8, 0
    %10 = vsyncpa [#allocation4], 0
    %s11 = scalar_lea.sflag [#allocation4], 1
    %12 = vsyncpa %s11, 0
    loop: start=0, step=1, limit=10
    $region2: #{tpu_custom_call.1} parent=1 // loop_pre_header
      _
    $region3: #{tpu_custom_call.1} parent=1 // loop_header
      %s14 = sphi 0, %s18
      %p15 = scmp.ge.s32.totalorder %s14, 10
      %s24 = sphi 0, %s26
      %s27 = sphi 0, %s24
      %s28 = sphi 0, %s27
      %s44 = sphi 0, %s28
      %s48 = sphi 0, %s48
      %s50 = sphi 0, %s48
      %s51 = sphi 0, %s50
      %s65 = sphi 0, %s51
      %s71 = sphi 0, %s73
      %s74 = sphi 0, %s71
      %s75 = sphi 0, %s74
      %s91 = sphi 0, %s75
    $region4: #{tpu_custom_call.1} parent=1 // loop_header_branch
      %17 = sbr.rel (%p15) target = $region8
    $region5: #{tpu_custom_call.1} parent=1 // loop_body
      %s19 = ssub.s32 %s14, 1
      %s20 = ssub.s32 %s14, 2
      %s21 = sadd.s32 %s14, 1
      %s22 = ssub.s32 %s14, %s21
      %p23 = scmp.eq.s32.totalorder %s22, 0
      %s25 = sadd.s32 %s24, 1
      %s26 = scalar_select %p23, %s24, %s25
      %p29 = pneg %p23
      %p30 = scmp.eq.s32.totalorder %s14, 7
      %p31 = por %p29, %p30
      %p32 = scmp.ne.s32.totalorder %s24, %s27
      %p33 = scmp.eq.s32.totalorder %s14, 0
      %p34 = por %p32, %p33
      %p35 = scmp.ne.s32.totalorder %s24, %s27
      %p36 = scmp.eq.s32.totalorder %s19, 7
      %p37 = por %p35, %p36
      %p38 = scmp.ne.s32.totalorder %s27, %s28
      %p39 = scmp.eq.s32.totalorder %s19, 0
      %p40 = por %p38, %p39
      %p41 = scmp.ne.s32.totalorder %s27, %s28
      %p42 = scmp.eq.s32.totalorder %s20, 7
      %p43 = por %p41, %p42
      %p45 = scmp.ne.s32.totalorder %s28, %s44
      %p46 = scmp.eq.s32.totalorder %s20, 0
      %p47 = por %p45, %p46
      %s49 = sadd.s32 %s48, 1
      %p52 = scmp.eq.s32.totalorder %s14, 7
      %p53 = scmp.ne.s32.totalorder %s48, %s50
      %p54 = scmp.eq.s32.totalorder %s14, 0
      %p55 = por %p53, %p54
      %p56 = scmp.ne.s32.totalorder %s48, %s50
      %p57 = scmp.eq.s32.totalorder %s19, 7
      %p58 = por %p56, %p57
      %p59 = scmp.ne.s32.totalorder %s50, %s51
      %p60 = scmp.eq.s32.totalorder %s19, 0
      %p61 = por %p59, %p60
      %p62 = scmp.ne.s32.totalorder %s50, %s51
      %p63 = scmp.eq.s32.totalorder %s20, 7
      %p64 = por %p62, %p63
      %p66 = scmp.ne.s32.totalorder %s51, %s65
      %p67 = scmp.eq.s32.totalorder %s20, 0
      %p68 = por %p66, %p67
      %s69 = ssub.s32 %s14, %s21
      %p70 = scmp.eq.s32.totalorder %s69, 0
      %s72 = sadd.s32 %s71, 1
      %s73 = scalar_select %p70, %s71, %s72
      %p76 = pneg %p70
      %p77 = scmp.eq.s32.totalorder %s14, 7
      %p78 = por %p76, %p77
      %p79 = scmp.ne.s32.totalorder %s71, %s74
      %p80 = scmp.eq.s32.totalorder %s14, 0
      %p81 = por %p79, %p80
      %p82 = scmp.ne.s32.totalorder %s71, %s74
      %p83 = scmp.eq.s32.totalorder %s19, 7
      %p84 = por %p82, %p83
      %p85 = scmp.ne.s32.totalorder %s74, %s75
      %p86 = scmp.eq.s32.totalorder %s19, 0
      %p87 = por %p85, %p86
      %p88 = scmp.ne.s32.totalorder %s74, %s75
      %p89 = scmp.eq.s32.totalorder %s20, 7
      %p90 = por %p88, %p89
      %p92 = scmp.ne.s32.totalorder %s75, %s91
      %p93 = scmp.eq.s32.totalorder %s20, 0
      %p94 = por %p92, %p93
      %p95 = scmp.le.s32.totalorder 1, %s14
      %p96 = scmp.lt.s32.totalorder %s14, 9
      %p97 = pnand %p95, %p96
      %p98 = pneg %p97
      // Predicated region
      $region9: #{tpu_custom_call.1} parent=5 // pred_check
        _
      $region10: #{tpu_custom_call.1} parent=5 // pred_check_branch
        %100 = sbr.rel (%p97) target = $region12
      $region11: #{tpu_custom_call.1} parent=5 // pred_region
        %s101 = ssub.s32 %s14, 1
        // Predicated region
        $region13: #{tpu_custom_call.1} parent=11 // pred_check
          %p102 = pneg %p61
        $region14: #{tpu_custom_call.1} parent=11 // pred_check_branch
          %104 = sbr.rel (%p102) target = $region16
        $region15: #{tpu_custom_call.1} parent=11 // pred_region
          _
        $region16: #{tpu_custom_call.1} parent=11 // pred_fallthru
          _
      $region12: #{tpu_custom_call.1} parent=5 // pred_fallthru
        _
      %p105 = scmp.lt.s32.totalorder %s14, 8
      // Predicated region
      $region17: #{tpu_custom_call.1} parent=5 // pred_check
        %p106 = pneg %p105
      $region18: #{tpu_custom_call.1} parent=5 // pred_check_branch
        %108 = sbr.rel (%p106) target = $region20
      $region19: #{tpu_custom_call.1} parent=5 // pred_region
        // Predicated region
        $region21: #{tpu_custom_call.1} parent=19 // pred_check
          %p109 = pneg %p34
        $region22: #{tpu_custom_call.1} parent=19 // pred_check_branch
          %111 = sbr.rel (%p109) target = $region24
        $region23: #{tpu_custom_call.1} parent=19 // pred_region
          %s112 = sand.u32 %s24, 1
          %s113 = scalar_lea.sflag [#allocation3], %s112
          %s114 = sand.u32 %s24, 1
          %s115 = smul.addr %s114, 2
          %s116 = scalar_lea.vmem [#allocation2], %s115
          %118 = vsyncadd %s113, 0
          %s119 = smul.addr %s14, 2
          %s120 = scalar_lea.hbm %s0, %s119
          %s122 = sshll.u32 %s120, 4
          %s123 = int_to_ptr.hbm [resolvable:$true] %s122
          %s124 = sshll.u32 %s116, 4
          %s125 = int_to_ptr.vmem [resolvable:$true] %s124
          %127 = dma.hbm_to_vmem [thread:$0]  %s123, 32, %s125, %s113
        $region24: #{tpu_custom_call.1} parent=19 // pred_fallthru
          _
      $region20: #{tpu_custom_call.1} parent=5 // pred_fallthru
        _
      %p128 = scmp.le.s32.totalorder 1, %s14
      %p129 = scmp.lt.s32.totalorder %s14, 9
      %p130 = pnand %p128, %p129
      %p131 = pneg %p130
      // Predicated region
      $region25: #{tpu_custom_call.1} parent=5 // pred_check
        _
      $region26: #{tpu_custom_call.1} parent=5 // pred_check_branch
        %133 = sbr.rel (%p130) target = $region28
      $region27: #{tpu_custom_call.1} parent=5 // pred_region
        %s134 = ssub.s32 %s14, 1
        %s135 = sand.u32 %s27, 1
        %s136 = scalar_lea.sflag [#allocation3], %s135
        %s137 = sand.u32 %s27, 1
        %s138 = smul.addr %s137, 2
        %s139 = scalar_lea.vmem [#allocation2], %s138
        // Predicated region
        $region29: #{tpu_custom_call.1} parent=27 // pred_check
          %p140 = pneg %p40
        $region30: #{tpu_custom_call.1} parent=27 // pred_check_branch
          %142 = sbr.rel (%p140) target = $region32
        $region31: #{tpu_custom_call.1} parent=27 // pred_region
          %144 = dma.done %s136, 32
        $region32: #{tpu_custom_call.1} parent=27 // pred_fallthru
          _
        %s145 = sand.u32 %s27, 1
        %s146 = scalar_lea.sflag [#allocation3], %s145
        %s147 = sand.u32 %s27, 1
        %s148 = smul.addr %s147, 2
        %s149 = scalar_lea.vmem [#allocation2], %s148
        %p150 = pneg %p40
        %p151 = pneg %p37
        %p152 = pneg %p61
        %p153 = pneg %p58
        %p154 = pneg %p87
        %p155 = pneg %p84
        %s156 = sand.u32 %s74, 1
        %s157 = scalar_lea.sflag [#allocation4], %s156
        %s158 = sand.u32 %s74, 1
        %s159 = smul.addr %s158, 2
        %s160 = scalar_lea.vmem [#allocation5], %s159
        %s161 = scalar_lea.vmem %s1, %s19
        %v162 = vld [vmem:[%s161] sm:$0x1]
        %v163 = vld [vmem:[%s139] sm:$0x3]
        %v164 = vmul.f32 %v163, %v163
        %vm165 = vcmask 254976
        %v166 = vsel %vm165, %v164, 0.0
        %167 = vadd.xlane.f32.xlu0 %v166
        %v168 = vpop.xlane.xlu0 %167
        %v169 = vadd.f32 %v168, 1e-05
        %v170 = vrsqrt.pop %v169
        %v171 = vmul.f32 %v170, %v169
        %v172 = vmul.f32 %v171, %v170
        %v173 = vmul.f32 0.5, %v172
        %v174 = vsub.f32 1.5, %v173
        %v175 = vmul.f32 %v170, %v174
        %v176 = vmul.f32 %v169, %v175
        %vm177 = vcmp.eq.f32.partialorder %v169, inf
        %v178 = vsel %vm177, %v169, %v176
        %vm179 = vcmp.eq.f32.partialorder %v169, 0.0
        %v180 = vand.u32 %v169, 2147483648
        %v181 = vsel %vm179, %v180, %v178
        %v183 = vperm.slane %v162, 0
        %v185 = vmul.f32 %v181, %v183
        %v186 = vmul.f32 %v185, %v185
        %vm187 = vcmask 1024
        %v188 = vsel %vm187, %v186, 0.0
        %v189 = vrot.slane %v188, 4
        %v190 = vadd.f32 %v188, %v189
        %v191 = vrot.slane %v190, 2
        %v192 = vadd.f32 %v190, %v191
        %v193 = vrot.slane %v192, 1
        %v194 = vadd.f32 %v192, %v193
        %v195 = vrcp.pop 2.0
        %v196 = vmul.f32 2.0, %v195
        %v197 = vsub.f32 1.0, %v196
        %v198 = vmul.f32 %v195, %v197
        %v199 = vadd.f32 %v195, %v198
        %vm200 = vweird.f32 %v195
        %v201 = vsel %vm200, %v195, %v199
        %v202 = vmul.f32 %v194, %v201
        %v203 = vadd.f32 %v202, 1e-05
        %v204 = vrsqrt.pop %v203
        %v205 = vmul.f32 %v204, %v203
        %v206 = vmul.f32 %v205, %v204
        %v207 = vmul.f32 0.5, %v206
        %v208 = vsub.f32 1.5, %v207
        %v209 = vmul.f32 %v204, %v208
        %vm210 = vweird.f32 %v203
        %vm211 = vweird.f32 %v204
        %vm212 = vmor %vm210, %vm211
        %v213 = vsel %vm212, %v204, %v209
        %215 = vrot.lane.b32.xlu0 %v213, 1
        %v216 = vpop.permute.xlu0 %215
        %v218 = vmul.f32 %v162, %v216
        %v220 = vperm.slane %v218, 0
        %221 = vrot.lane.b32.xlu0 %v220, 127
        %v222 = vpop.permute.xlu0 %221
        %v224 = vmul.f32 %v185, %v222
        %225 = vrot.lane.b32.xlu0 %v183, 126
        %v226 = vpop.permute.xlu0 %225
        %v228 = vadd.f32 %v224, %v226
        %v229 = vtanh.pop %v228
        %v230 = vadd.f32 %v229, 1.0
        %232 = vset.pattern.permute.xlu0 0
        %233 = vperm.xlu0 %232, %v230
        %v234 = vpop.permute.xlu0 %233
        %v236 = vmul.f32 %v163, %v234
        %237 = vst.msk [vmem:[%s160] sm:$0x3] %vm165, %v236
        %s238 = sand.u32 %s74, 1
        %s239 = scalar_lea.sflag [#allocation4], %s238
        %s240 = sand.u32 %s74, 1
        %s241 = smul.addr %s240, 2
        %s242 = scalar_lea.vmem [#allocation5], %s241
        // Predicated region
        $region33: #{tpu_custom_call.1} parent=27 // pred_check
          %p243 = pneg %p84
        $region34: #{tpu_custom_call.1} parent=27 // pred_check_branch
          %245 = sbr.rel (%p243) target = $region36
        $region35: #{tpu_custom_call.1} parent=27 // pred_region
          %247 = vsyncadd %s239, 0
          %s248 = smul.addr %s19, 2
          %s249 = scalar_lea.hbm %s2, %s248
          %s251 = sshll.u32 %s242, 4
          %s252 = int_to_ptr.vmem [resolvable:$true] %s251
          %s253 = sshll.u32 %s249, 4
          %s254 = int_to_ptr.hbm [resolvable:$true] %s253
          %256 = dma.vmem_to_hbm [thread:$0]  %s252, 32, %s254, %s239
        $region36: #{tpu_custom_call.1} parent=27 // pred_fallthru
          _
      $region28: #{tpu_custom_call.1} parent=5 // pred_fallthru
        _
      %p257 = scmp.le.s32.totalorder 2, %s14
      // Predicated region
      $region37: #{tpu_custom_call.1} parent=5 // pred_check
        %p258 = pneg %p257
      $region38: #{tpu_custom_call.1} parent=5 // pred_check_branch
        %260 = sbr.rel (%p258) target = $region40
      $region39: #{tpu_custom_call.1} parent=5 // pred_region
        %s261 = ssub.s32 %s14, 2
        // Predicated region
        $region41: #{tpu_custom_call.1} parent=39 // pred_check
          %p262 = pneg %p90
        $region42: #{tpu_custom_call.1} parent=39 // pred_check_branch
          %264 = sbr.rel (%p262) target = $region44
        $region43: #{tpu_custom_call.1} parent=39 // pred_region
          %s265 = sand.u32 %s75, 1
          %s266 = scalar_lea.sflag [#allocation4], %s265
          %s267 = sand.u32 %s75, 1
          %s268 = smul.addr %s267, 2
          %s269 = scalar_lea.vmem [#allocation5], %s268
          %271 = dma.done %s266, 32
        $region44: #{tpu_custom_call.1} parent=39 // pred_fallthru
          _
      $region40: #{tpu_custom_call.1} parent=5 // pred_fallthru
        _
    $region6: #{tpu_custom_call.1} parent=1 // loop_footer
      %s18 = sadd.s32 1, %s14
    $region7: #{tpu_custom_call.1} parent=1 // loop_footer_branch
      %13 = sbr.rel target = $region3
    $region8: #{tpu_custom_call.1} parent=1 // loop_exit
      _
    %272 = vsyncpa [#allocation3], 1
    %s273 = scalar_lea.sflag [#allocation3], 1
    %274 = vsyncpa %s273, 1
    %275 = vsyncpa [#allocation4], 1
    %s276 = scalar_lea.sflag [#allocation4], 1
    %277 = vsyncpa %s276, 1

</llo_original>
